<compile_context>
chip_gen: v5e
topology: v5e:2x2
jax: 0.10.0
libtpu: 0.0.40
codegen_flags: <defaults>
</compile_context>

<pallas_src>
import functools
import math

import jax
import jax.numpy as jnp
from jax.experimental import pallas as pl
from jax.experimental.pallas import tpu as pltpu

_LANE = 128
_MIB = 1024 * 1024


def _swish_kernel(x_ref, o_ref, *, compute_dtype):
    x = x_ref[...].astype(compute_dtype)
    # sigmoid(x) = 1 / (1 + exp(-x)): one EUP exp + a near-free approx recip.
    denom = jnp.exp(-x).astype(jnp.float32) + 1.0
    sig = pl.reciprocal(denom, approx=True)
    o_ref[...] = (x.astype(jnp.float32) * sig).astype(o_ref.dtype)


def _round_up(a, m):
    return ((a + m - 1) // m) * m


def _sublane_multiple(dtype):
    # f32 -> 8, bf16 -> 16, int8/fp8 -> 32 (sub-32-bit dtypes pack sublanes).
    itemsize = jnp.dtype(dtype).itemsize
    return max(8, 8 * (4 // max(itemsize, 1)))


def _chip_config():
    """Returns (block_bytes, vmem_limit_bytes or None, native_bf16_compute)."""
    kind = ""
    try:
        kind = jax.devices()[0].device_kind.lower()
    except Exception:
        pass
    if "v7" in kind:
        blk = 6 * _MIB
        return blk, 4 * blk + 8 * _MIB, True        # 32 MiB scoped VMEM
    if "v6" in kind:
        return 4 * _MIB, None, True                 # 16 MiB in flight < 32 MiB default
    # v5e / v5p / v4 / unknown: 16 MiB scoped-VMEM default -> keep 2 MiB blocks.
    return 2 * _MIB, None, False


def _choose_tiles(B, H, W, dtype, block_bytes):
    itemsize = jnp.dtype(dtype).itemsize
    sub = _sublane_multiple(dtype)

    # Lane (last-dim) tile: keep full width unless even a minimal sublane
    # strip exceeds the per-block budget (then block in 128-lane multiples).
    tw = W
    if sub * _round_up(W, _LANE) * itemsize > block_bytes and W > _LANE:
        tw = max(_LANE, (block_bytes // (sub * itemsize * _LANE)) * _LANE)
    row_bytes = _round_up(tw, _LANE) * itemsize

    # Sublane (second-to-last dim) tile: multiple of the packing width or full.
    max_th = max(1, block_bytes // row_bytes)
    th = H if max_th >= H else max(sub, (max_th // sub) * sub)

    # Leading-dim tile.
    slab_bytes = _round_up(th, sub) * row_bytes
    bb = max(1, min(B, block_bytes // max(slab_bytes, 1)))

    # Megacore (v7x): make sure there are >= 2 blocks when the tensor allows.
    if pl.cdiv(B, bb) * pl.cdiv(H, th) * pl.cdiv(W, tw) == 1:
        if B >= 2:
            bb = pl.cdiv(B, 2)
        elif H > sub:
            th = min(th, _round_up(pl.cdiv(H, 2), sub))
        elif W > _LANE:
            tw = min(tw, _round_up(pl.cdiv(W, 2), _LANE))

    # Balance partial blocks (avoid a tiny straggler last block).
    gb, gh = pl.cdiv(B, bb), pl.cdiv(H, th)
    if gb > 1:
        bb = pl.cdiv(B, gb)
    if gh > 1 and th < H:
        th = _round_up(pl.cdiv(H, gh), sub)
    return bb, th, tw


@functools.partial(jax.jit, static_argnames=("block_bytes",))
def swish(x, block_bytes=None):
    """Applies x * sigmoid(x) elementwise via a Pallas TPU kernel."""
    orig_shape = x.shape
    dtype = x.dtype
    if x.size == 0:
        return x

    chip_block, vmem_limit, native_lowp = _chip_config()
    if block_bytes is None:
        block_bytes = chip_block
    block_bytes = int(block_bytes)

    # Collapse only leading dims: the TPU tiled layout covers the last two
    # dims, so this reshape is a bitcast (no relayout copy before/after).
    if x.ndim >= 2:
        B = math.prod(orig_shape[:-2])
        H, W = orig_shape[-2], orig_shape[-1]
    else:  # scalars / 1-D
        B, H, W = 1, 1, int(x.size)
    x3 = x.reshape(B, H, W)

    bb, th, tw = _choose_tiles(B, H, W, dtype, block_bytes)
    grid = (pl.cdiv(B, bb), pl.cdiv(H, th), pl.cdiv(W, tw))

    # bf16 computed natively on v6e/v7x (bf16 EUP); f32 everywhere else.
    compute_dtype = (
        jnp.bfloat16
        if (native_lowp and jnp.dtype(dtype) == jnp.dtype(jnp.bfloat16))
        else jnp.float32
    )

    n = x.size
    itemsize = jnp.dtype(dtype).itemsize
    cp_kwargs = dict(dimension_semantics=("parallel",) * len(grid))
    if vmem_limit is not None:
        cp_kwargs["vmem_limit_bytes"] = int(vmem_limit)

    out = pl.pallas_call(
        functools.partial(_swish_kernel, compute_dtype=compute_dtype),
        out_shape=jax.ShapeDtypeStruct((B, H, W), dtype),
        grid_spec=pltpu.PrefetchScalarGridSpec(
            num_scalar_prefetch=0,
            grid=grid,
            in_specs=[pl.BlockSpec((bb, th, tw), lambda i, j, k: (i, j, k))],
            out_specs=pl.BlockSpec((bb, th, tw), lambda i, j, k: (i, j, k)),
        ),
        compiler_params=pltpu.CompilerParams(**cp_kwargs),
        cost_estimate=pl.CostEstimate(
            flops=4 * n,
            transcendentals=2 * n,
            bytes_accessed=2 * n * itemsize,
        ),
    )(x3)

    return out.reshape(orig_shape)


if __name__ == "__main__":
    key = jax.random.PRNGKey(0)

    # NCHW-like small input, matches the module's elementwise forward.
    x = jax.random.normal(key, (2, 4, 16, 16), dtype=jnp.float32)
    y = swish(x)
    jax.block_until_ready(y)
    y_ref = x * jax.nn.sigmoid(x)
    assert y.shape == x.shape and y.dtype == x.dtype
    assert jnp.allclose(y, y_ref, atol=2e-2, rtol=2e-2)

    # Ragged trailing dims (not multiples of 8/128): native-shape path, no pad.
    x2 = jax.random.normal(jax.random.PRNGKey(1), (3, 5, 7), dtype=jnp.float32)
    y2 = swish(x2)
    jax.block_until_ready(y2)
    assert y2.shape == x2.shape
    assert jnp.allclose(y2, x2 * jax.nn.sigmoid(x2), atol=2e-2, rtol=2e-2)

    # bf16 path (computed natively in bf16 on v6e/v7x, in f32 on older chips).
    x3 = jax.random.normal(jax.random.PRNGKey(2), (2, 8, 32), dtype=jnp.bfloat16)
    y3 = swish(x3)
    jax.block_until_ready(y3)
    ref3 = (x3.astype(jnp.float32) * jax.nn.sigmoid(x3.astype(jnp.float32)))
    assert y3.shape == x3.shape and y3.dtype == x3.dtype
    assert jnp.allclose(y3.astype(jnp.float32), ref3, atol=1e-1, rtol=1e-1)

    print("KERNEL_OK")
</pallas_src>

<mosaic_0001>
module attributes {stable_mosaic.version = 11 : i64} {
  func.func @_swish_kernel(%arg0: i32, %arg1: i32, %arg2: i32, %arg3: memref<4x16x16xf32, #tpu.memory_space<vmem>>, %arg4: memref<4x16x16xf32, #tpu.memory_space<vmem>>) attributes {dimension_semantics = [#tpu.dimension_semantics<parallel>, #tpu.dimension_semantics<parallel>, #tpu.dimension_semantics<parallel>], iteration_bounds = array<i64: 2, 1, 1>, scalar_prefetch = 0 : i64, scratch_operands = 0 : i64, tpu.core_type = #tpu.core_type<tc>, window_params = [{transform_indices = @transform_0, window_bounds = array<i64: 4, 16, 16>}, {transform_indices = @transform_1, window_bounds = array<i64: 4, 16, 16>}]} {
    %c0 = arith.constant 0 : index
    %c0_0 = arith.constant 0 : index
    %c0_1 = arith.constant 0 : index
    %0 = vector.load %arg3[%c0, %c0_0, %c0_1] : memref<4x16x16xf32, #tpu.memory_space<vmem>>, vector<4x16x16xf32>
    %cst = arith.constant 0.000000e+00 : f32
    %1 = vector.broadcast %cst : f32 to vector<4x16x16xf32>
    %2 = arith.subf %1, %0 : vector<4x16x16xf32>
    %3 = math.exp %2 : vector<4x16x16xf32>
    %cst_2 = arith.constant 1.000000e+00 : f32
    %4 = vector.broadcast %cst_2 : f32 to vector<4x16x16xf32>
    %5 = arith.addf %3, %4 : vector<4x16x16xf32>
    %6 = tpu.reciprocal %5 {approx = true} : vector<4x16x16xf32> -> vector<4x16x16xf32>
    %7 = arith.mulf %0, %6 : vector<4x16x16xf32>
    %c0_3 = arith.constant 0 : index
    %c0_4 = arith.constant 0 : index
    %c0_5 = arith.constant 0 : index
    %8 = vector.load %arg4[%c0_3, %c0_4, %c0_5] : memref<4x16x16xf32, #tpu.memory_space<vmem>>, vector<4x16x16xf32>
    tpu.vector_store %arg4[%c0_3, %c0_4, %c0_5], %7 {strides = array<i32>} : memref<4x16x16xf32, #tpu.memory_space<vmem>>, vector<4x16x16xf32>,
    return
  }
  func.func @transform_0(%arg0: i32, %arg1: i32, %arg2: i32) -> (i32, i32, i32) {
    %c0_i32 = arith.constant 0 : i32
    return %arg0, %arg1, %arg2 : i32, i32, i32
  }
  func.func @transform_1(%arg0: i32, %arg1: i32, %arg2: i32) -> (i32, i32, i32) {
    %c0_i32 = arith.constant 0 : i32
    return %arg0, %arg1, %arg2 : i32, i32, i32
  }
}

</mosaic_0001>

<llo_original>
// kernel: swish.1
$region0: #{swish.1}
  #allocation0 [shape = 'u32[]', space=smem, size = 0x4, offset = 0x4, fixed_abs, tag = 'smem constant byte address 0x4 - core index']
  #allocation1 [shape = 'u32[72,128]{1,0:T(1,128)}', space=vmem, size = 0x9000, scoped, tag = 'internal scratch']
  %s0 = inlined_call_operand.hbm [shape: f32[8,16,16], index: 0, kind: input, shape index: {}]
  %s1 = inlined_call_operand.hbm [shape: f32[8,16,16], index: 1, kind: output, shape index: {}]
  %s2 = sld [smem:[#allocation0]]
  $region41: #{swish.1} parent=0
    _
  %s4 = ssub.s32 1, %s2
  %s5 = scalar_select 0, %s4, %s2
  $region1: #{swish.1} parent=0
    #allocation2 [shape = 'u8[65536]{0}', space=vmem, size = 0x10000, scoped, tag = 'input window, operand 0']
    #allocation3 [shape = 's32[2]{0}', space=sflag, size = 0x8, scoped, tag = 'scoped memory for swish.1']
    #allocation4 [shape = 's32[2]{0}', space=sflag, size = 0x8, scoped, tag = 'scoped memory for swish.1']
    #allocation5 [shape = 'u8[65536]{0}', space=vmem, size = 0x10000, scoped, tag = 'output window, operand 0']
    %6 = vsyncpa [#allocation3], 0
    %s7 = scalar_lea.sflag [#allocation3], 1
    %8 = vsyncpa %s7, 0
    %9 = vsyncpa [#allocation4], 0
    %s10 = scalar_lea.sflag [#allocation4], 1
    %11 = vsyncpa %s10, 0
    loop: start=0, step=1, limit=4
    $region2: #{swish.1} parent=1 // loop_pre_header
      _
    $region3: #{swish.1} parent=1 // loop_header
      %s13 = sphi 0, %s17
      %p14 = scmp.ge.s32.totalorder %s13, 4
      %s20 = sphi 0, %s39
      %s21 = sphi 0, %s35
      %s22 = sphi 0, %s31
      %s23 = sphi 0, %s20
      %s24 = sphi 0, %s21
      %s25 = sphi 0, %s22
      %s26 = sphi 0, %s23
      %s27 = sphi 0, %s24
      %s28 = sphi 0, %s25
      %s46 = sphi 0, %s48
      %s49 = sphi 0, %s46
      %s50 = sphi 0, %s49
      %s66 = sphi 0, %s50
      %s76 = sphi 0, %s78
      %s79 = sphi 0, %s76
      %s80 = sphi 0, %s79
      %s96 = sphi 0, %s80
    $region4: #{swish.1} parent=1 // loop_header_branch
      %16 = sbr.rel (%p14) target = $region8
    $region5: #{swish.1} parent=1 // loop_body
      %s18 = ssub.s32 %s13, 1
      %s19 = ssub.s32 %s13, 2
      %s29 = sadd.s32 1, %s22
      %p30 = scmp.ge.s32.totalorder %s29, 1
      %s31 = scalar_select %p30, 0, %s29
      %s32 = sadd.s32 1, %s21
      %s33 = scalar_select %p30, %s32, %s21
      %p34 = scmp.ge.s32.totalorder %s33, 1
      %s35 = scalar_select %p34, 0, %s33
      %s36 = sadd.s32 1, %s20
      %s37 = scalar_select %p34, %s36, %s20
      %p38 = scmp.ge.s32.totalorder %s37, 2
      %s39 = scalar_select %p38, 0, %s37
      %s40 = ssub.s32 %s20, %s39
      %s41 = ssub.s32 %s21, %s35
      %s42 = sor.u32 %s40, %s41
      %s43 = ssub.s32 %s22, %s31
      %s44 = sor.u32 %s42, %s43
      %p45 = scmp.eq.s32.totalorder %s44, 0
      %s47 = sadd.s32 %s46, 1
      %s48 = scalar_select %p45, %s46, %s47
      %p51 = pneg %p45
      %p52 = scmp.eq.s32.totalorder %s13, 1
      %p53 = por %p51, %p52
      %p54 = scmp.ne.s32.totalorder %s46, %s49
      %p55 = scmp.eq.s32.totalorder %s13, 0
      %p56 = por %p54, %p55
      %p57 = scmp.ne.s32.totalorder %s46, %s49
      %p58 = scmp.eq.s32.totalorder %s18, 1
      %p59 = por %p57, %p58
      %p60 = scmp.ne.s32.totalorder %s49, %s50
      %p61 = scmp.eq.s32.totalorder %s18, 0
      %p62 = por %p60, %p61
      %p63 = scmp.ne.s32.totalorder %s49, %s50
      %p64 = scmp.eq.s32.totalorder %s19, 1
      %p65 = por %p63, %p64
      %p67 = scmp.ne.s32.totalorder %s50, %s66
      %p68 = scmp.eq.s32.totalorder %s19, 0
      %p69 = por %p67, %p68
      %s70 = ssub.s32 %s20, %s39
      %s71 = ssub.s32 %s21, %s35
      %s72 = sor.u32 %s70, %s71
      %s73 = ssub.s32 %s22, %s31
      %s74 = sor.u32 %s72, %s73
      %p75 = scmp.eq.s32.totalorder %s74, 0
      %s77 = sadd.s32 %s76, 1
      %s78 = scalar_select %p75, %s76, %s77
      %p81 = pneg %p75
      %p82 = scmp.eq.s32.totalorder %s13, 1
      %p83 = por %p81, %p82
      %p84 = scmp.ne.s32.totalorder %s76, %s79
      %p85 = scmp.eq.s32.totalorder %s13, 0
      %p86 = por %p84, %p85
      %p87 = scmp.ne.s32.totalorder %s76, %s79
      %p88 = scmp.eq.s32.totalorder %s18, 1
      %p89 = por %p87, %p88
      %p90 = scmp.ne.s32.totalorder %s79, %s80
      %p91 = scmp.eq.s32.totalorder %s18, 0
      %p92 = por %p90, %p91
      %p93 = scmp.ne.s32.totalorder %s79, %s80
      %p94 = scmp.eq.s32.totalorder %s19, 1
      %p95 = por %p93, %p94
      %p97 = scmp.ne.s32.totalorder %s80, %s96
      %p98 = scmp.eq.s32.totalorder %s19, 0
      %p99 = por %p97, %p98
      %p100 = scmp.le.s32.totalorder 1, %s13
      %p101 = scmp.lt.s32.totalorder %s13, 3
      %p102 = pnand %p100, %p101
      %p103 = pneg %p102
      // Predicated region
      $region9: #{swish.1} parent=5 // pred_check
        _
      $region10: #{swish.1} parent=5 // pred_check_branch
        %105 = sbr.rel (%p102) target = $region12
      $region11: #{swish.1} parent=5 // pred_region
        %s106 = ssub.s32 %s13, 1
      $region12: #{swish.1} parent=5 // pred_fallthru
        _
      %p107 = scmp.lt.s32.totalorder %s13, 2
      // Predicated region
      $region13: #{swish.1} parent=5 // pred_check
        %p108 = pneg %p107
      $region14: #{swish.1} parent=5 // pred_check_branch
        %110 = sbr.rel (%p108) target = $region16
      $region15: #{swish.1} parent=5 // pred_region
        // Predicated region
        $region17: #{swish.1} parent=15 // pred_check
          %p111 = pneg %p56
        $region18: #{swish.1} parent=15 // pred_check_branch
          %113 = sbr.rel (%p111) target = $region20
        $region19: #{swish.1} parent=15 // pred_region
          %s114 = sand.u32 %s46, 1
          %s115 = scalar_lea.sflag [#allocation3], %s114
          %s116 = sand.u32 %s46, 1
          %s117 = smul.addr %s116, 64
          %s118 = scalar_lea.vmem [#allocation2], %s117
          %s119 = smul.u32 4, %s20
          %s120 = smul.u32 2, %s21
          %122 = vsyncadd %s115, 0
          %s123 = sadd.s32 %s22, %s120
          %s124 = smul.addr %s119, 2
          %s125 = sadd.s32 %s123, %s124
          %s126 = smul.addr %s125, 8
          %s127 = scalar_lea.hbm %s0, %s126
          %s128 = sshll.u32 %s127, 4
          %s129 = int_to_ptr.hbm [resolvable:$true] %s128
          %s130 = sshll.u32 %s118, 4
          %s131 = int_to_ptr.vmem [resolvable:$true] %s130
          %136 = dma.hbm_to_vmem [thread:$0]  %s129, 1024, %s131, %s115, 128, 128, 8
        $region20: #{swish.1} parent=15 // pred_fallthru
          _
      $region16: #{swish.1} parent=5 // pred_fallthru
        _
      %p137 = scmp.le.s32.totalorder 1, %s13
      %p138 = scmp.lt.s32.totalorder %s13, 3
      %p139 = pnand %p137, %p138
      %p140 = pneg %p139
      // Predicated region
      $region21: #{swish.1} parent=5 // pred_check
        _
      $region22: #{swish.1} parent=5 // pred_check_branch
        %142 = sbr.rel (%p139) target = $region24
      $region23: #{swish.1} parent=5 // pred_region
        %s143 = ssub.s32 %s13, 1
        %s144 = sand.u32 %s49, 1
        %s145 = scalar_lea.sflag [#allocation3], %s144
        %s146 = sand.u32 %s49, 1
        %s147 = smul.addr %s146, 64
        %s148 = scalar_lea.vmem [#allocation2], %s147
        // Predicated region
        $region25: #{swish.1} parent=23 // pred_check
          %p149 = pneg %p62
        $region26: #{swish.1} parent=23 // pred_check_branch
          %151 = sbr.rel (%p149) target = $region28
        $region27: #{swish.1} parent=23 // pred_region
          %153 = dma.done %s145, 1024
        $region28: #{swish.1} parent=23 // pred_fallthru
          _
        %s154 = sand.u32 %s49, 1
        %s155 = scalar_lea.sflag [#allocation3], %s154
        %s156 = sand.u32 %s49, 1
        %s157 = smul.addr %s156, 64
        %s158 = scalar_lea.vmem [#allocation2], %s157
        %p159 = pneg %p62
        %p160 = pneg %p59
        %p161 = pneg %p92
        %p162 = pneg %p89
        %s163 = sand.u32 %s79, 1
        %s164 = scalar_lea.sflag [#allocation4], %s163
        %s165 = sand.u32 %s79, 1
        %s166 = smul.addr %s165, 64
        %s167 = scalar_lea.vmem [#allocation5], %s166
        %s168 = smul.u32 4, %s23
        %s169 = smul.u32 2, %s24
        %s170 = smul.u32 4, %s23
        %s171 = smul.u32 2, %s24
        %v172 = vld [vmem:[%s148] sm:$0xff]
        %v173 = vld [vmem:[%s148 + $0x8] sm:$0xff]
        %v174 = vld [vmem:[%s148 + $0x10] sm:$0xff]
        %v175 = vld [vmem:[%s148 + $0x18] sm:$0xff]
        %v176 = vld [vmem:[%s148 + $0x20] sm:$0xff]
        %v177 = vld [vmem:[%s148 + $0x28] sm:$0xff]
        %v178 = vld [vmem:[%s148 + $0x30] sm:$0xff]
        %v179 = vld [vmem:[%s148 + $0x38] sm:$0xff]
        %v180 = vsub.f32 0.0, %v172
        %v181 = vsub.f32 0.0, %v173
        %v182 = vsub.f32 0.0, %v174
        %v183 = vsub.f32 0.0, %v175
        %v184 = vsub.f32 0.0, %v176
        %v185 = vsub.f32 0.0, %v177
        %v186 = vsub.f32 0.0, %v178
        %v187 = vsub.f32 0.0, %v179
        %v188 = vmul.f32 %v180, 1.442695
        %v189 = vpow.pop %v188
        %v190 = vmul.f32 %v181, 1.442695
        %v191 = vpow.pop %v190
        %v192 = vmul.f32 %v182, 1.442695
        %v193 = vpow.pop %v192
        %v194 = vmul.f32 %v183, 1.442695
        %v195 = vpow.pop %v194
        %v196 = vmul.f32 %v184, 1.442695
        %v197 = vpow.pop %v196
        %v198 = vmul.f32 %v185, 1.442695
        %v199 = vpow.pop %v198
        %v200 = vmul.f32 %v186, 1.442695
        %v201 = vpow.pop %v200
        %v202 = vmul.f32 %v187, 1.442695
        %v203 = vpow.pop %v202
        %v204 = vadd.f32 %v189, 1.0
        %v205 = vadd.f32 %v191, 1.0
        %v206 = vadd.f32 %v193, 1.0
        %v207 = vadd.f32 %v195, 1.0
        %v208 = vadd.f32 %v197, 1.0
        %v209 = vadd.f32 %v199, 1.0
        %v210 = vadd.f32 %v201, 1.0
        %v211 = vadd.f32 %v203, 1.0
        %v212 = vrcp.pop %v204
        %v213 = vrcp.pop %v205
        %v214 = vrcp.pop %v206
        %v215 = vrcp.pop %v207
        %v216 = vrcp.pop %v208
        %v217 = vrcp.pop %v209
        %v218 = vrcp.pop %v210
        %v219 = vrcp.pop %v211
        %v220 = vmul.f32 %v172, %v212
        %v221 = vmul.f32 %v173, %v213
        %v222 = vmul.f32 %v174, %v214
        %v223 = vmul.f32 %v175, %v215
        %v224 = vmul.f32 %v176, %v216
        %v225 = vmul.f32 %v177, %v217
        %v226 = vmul.f32 %v178, %v218
        %v227 = vmul.f32 %v179, %v219
        %vm228 = vcmask 130048
        %229 = vst.msk [vmem:[%s167] sm:$0xff] %vm228, %v220
        %230 = vst.msk [vmem:[%s167 + $0x8] sm:$0xff] %vm228, %v221
        %231 = vst.msk [vmem:[%s167 + $0x10] sm:$0xff] %vm228, %v222
        %232 = vst.msk [vmem:[%s167 + $0x18] sm:$0xff] %vm228, %v223
        %233 = vst.msk [vmem:[%s167 + $0x20] sm:$0xff] %vm228, %v224
        %234 = vst.msk [vmem:[%s167 + $0x28] sm:$0xff] %vm228, %v225
        %235 = vst.msk [vmem:[%s167 + $0x30] sm:$0xff] %vm228, %v226
        %236 = vst.msk [vmem:[%s167 + $0x38] sm:$0xff] %vm228, %v227
        %s237 = sand.u32 %s79, 1
        %s238 = scalar_lea.sflag [#allocation4], %s237
        %s239 = sand.u32 %s79, 1
        %s240 = smul.addr %s239, 64
        %s241 = scalar_lea.vmem [#allocation5], %s240
        // Predicated region
        $region29: #{swish.1} parent=23 // pred_check
          %p242 = pneg %p89
        $region30: #{swish.1} parent=23 // pred_check_branch
          %244 = sbr.rel (%p242) target = $region32
        $region31: #{swish.1} parent=23 // pred_region
          %s245 = smul.u32 4, %s23
          %s246 = smul.u32 2, %s24
          %248 = vsyncadd %s238, 0
          %s249 = sadd.s32 %s25, %s246
          %s250 = smul.addr %s245, 2
          %s251 = sadd.s32 %s249, %s250
          %s252 = smul.addr %s251, 8
          %s253 = scalar_lea.hbm %s1, %s252
          %s254 = sshll.u32 %s241, 4
          %s255 = int_to_ptr.vmem [resolvable:$true] %s254
          %s256 = sshll.u32 %s253, 4
          %s257 = int_to_ptr.hbm [resolvable:$true] %s256
          %262 = dma.vmem_to_hbm [thread:$0]  %s255, 1024, %s257, %s238, 128, 128, 8
        $region32: #{swish.1} parent=23 // pred_fallthru
          _
      $region24: #{swish.1} parent=5 // pred_fallthru
        _
      %p263 = scmp.le.s32.totalorder 2, %s13
      // Predicated region
      $region33: #{swish.1} parent=5 // pred_check
        %p264 = pneg %p263
      $region34: #{swish.1} parent=5 // pred_check_branch
        %266 = sbr.rel (%p264) target = $region36
      $region35: #{swish.1} parent=5 // pred_region
        %s267 = ssub.s32 %s13, 2
        // Predicated region
        $region37: #{swish.1} parent=35 // pred_check
          %p268 = pneg %p95
        $region38: #{swish.1} parent=35 // pred_check_branch
          %270 = sbr.rel (%p268) target = $region40
        $region39: #{swish.1} parent=35 // pred_region
          %s271 = sand.u32 %s80, 1
          %s272 = scalar_lea.sflag [#allocation4], %s271
          %s273 = sand.u32 %s80, 1
          %s274 = smul.addr %s273, 64
          %s275 = scalar_lea.vmem [#allocation5], %s274
          %277 = dma.done %s272, 1024
        $region40: #{swish.1} parent=35 // pred_fallthru
          _
      $region36: #{swish.1} parent=5 // pred_fallthru
        _
    $region6: #{swish.1} parent=1 // loop_footer
      %s17 = sadd.s32 1, %s13
    $region7: #{swish.1} parent=1 // loop_footer_branch
      %12 = sbr.rel target = $region3
    $region8: #{swish.1} parent=1 // loop_exit
      _
    %278 = vsyncpa [#allocation3], 1
    %s279 = scalar_lea.sflag [#allocation3], 1
    %280 = vsyncpa %s279, 1
    %281 = vsyncpa [#allocation4], 1
    %s282 = scalar_lea.sflag [#allocation4], 1
    %283 = vsyncpa %s282, 1

</llo_original>
